<compile_context>
chip_gen: v7x
topology: tpu7x:2x2x1
jax: 0.10.0
libtpu: 0.0.40
codegen_flags: <defaults>
</compile_context>

<pallas_src>
import functools
import math

import jax
import jax.numpy as jnp
from jax.experimental import pallas as pl
from jax.experimental.pallas import tpu as pltpu


def _round_up(x, m):
    return ((x + m - 1) // m) * m


def _pick_tile(dim_aligned, max_tile):
    """Largest multiple of 128 <= max_tile that divides the 128-aligned dim."""
    if dim_aligned <= max_tile:
        return dim_aligned
    t = (max_tile // 128) * 128
    while t > 128 and dim_aligned % t != 0:
        t -= 128
    return t


def _pad2(a, rows, cols):
    if a.shape == (rows, cols):
        return a                                   # no HBM pad pass when aligned
    return jnp.pad(a, ((0, rows - a.shape[0]), (0, cols - a.shape[1])))


def _pad_row(v, cols):
    v = v.astype(jnp.float32)
    if v.shape[0] != cols:
        v = jnp.pad(v, (0, cols - v.shape[0]))
    return v.reshape(1, cols)


# Contract dim 1 of LHS (B, tk) with dim 1 of RHS (tn, tk) -> (B, tn).
_DN = (((1,), (1,)), ((), ()))


def _tile_product(xs, es, wmu, wsig, eps_out):
    """x@Wmu.T + ((x*eps_in)@Wsig.T)*eps_out for one (tn, tk) weight tile, f32."""
    # Noise composition stays f32 on the VPU; MXU operands are cast at the dot
    # boundary (native bf16 path when x/weights are bf16).
    xe = (xs.astype(jnp.float32) * es).astype(xs.dtype)
    mu = jax.lax.dot_general(xs, wmu, _DN, preferred_element_type=jnp.float32)
    sg = jax.lax.dot_general(xe, wsig, _DN, preferred_element_type=jnp.float32)
    return mu + sg * eps_out


def _noisy_kernel_single(x_ref, epsin_ref, wmu_ref, wsig_ref,
                         epsout_ref, beff_ref, o_ref):
    # Single K block: no accumulator scratch, write straight to the output.
    acc = _tile_product(x_ref[...], epsin_ref[...],
                        wmu_ref[...], wsig_ref[...], epsout_ref[...])
    o_ref[...] = (acc + beff_ref[...]).astype(o_ref.dtype)


def _noisy_kernel_multi(x_ref, epsin_ref, wmu_ref, wsig_ref,
                        epsout_ref, beff_ref, o_ref, acc_ref, *, tk):
    k = pl.program_id(1)

    @pl.when(k == 0)
    def _():
        acc_ref[...] = jnp.zeros_like(acc_ref)

    # x / eps_in are fully VMEM-resident; slice the current K window in place.
    start = pl.multiple_of(k * tk, tk)
    xs = x_ref[:, pl.ds(start, tk)]
    es = epsin_ref[:, pl.ds(start, tk)]
    acc_ref[...] += _tile_product(xs, es, wmu_ref[...], wsig_ref[...],
                                  epsout_ref[...])

    @pl.when(k == pl.num_programs(1) - 1)
    def _():
        o_ref[...] = (acc_ref[...] + beff_ref[...]).astype(o_ref.dtype)


def noisy_linear_forward(x, weight_mu, weight_sigma, bias_mu, bias_sigma,
                         eps_in, eps_out, *, tile_n=256, tile_k=2048):
    """y = x @ (W_mu + W_sigma * outer(eps_out, eps_in)).T + (b_mu + b_sigma*eps_out).

    `eps_in` / `eps_out` are the factored noise vectors produced by the
    module's reset_noise(); weight_epsilon == outer(eps_out, eps_in) and
    bias_epsilon == eps_out, so this matches the PyTorch forward exactly
    (modulo reassociation-level rounding).
    """
    B, K = x.shape
    N = weight_mu.shape[0]
    dtype = x.dtype

    # MXU operands in the activation dtype (no-op for the matched case).
    if weight_mu.dtype != dtype:
        weight_mu = weight_mu.astype(dtype)
    if weight_sigma.dtype != dtype:
        weight_sigma = weight_sigma.astype(dtype)

    sublane = 8 if jnp.dtype(dtype).itemsize >= 4 else 16
    B_pad = _round_up(B, sublane)
    N_pad = _round_up(N, 128)
    K_pad = _round_up(K, 128)
    tn = _pick_tile(N_pad, max(tile_n, 128))
    tk = _pick_tile(K_pad, max(tile_k, 128))
    nn, nk = N_pad // tn, K_pad // tk

    xp = _pad2(x, B_pad, K_pad)
    wmu = _pad2(weight_mu, N_pad, K_pad)       # skipped when already aligned
    wsig = _pad2(weight_sigma, N_pad, K_pad)   # skipped when already aligned

    eps_in_row = _pad_row(eps_in, K_pad)                                   # (1, K_pad) f32
    eps_out_row = _pad_row(eps_out, N_pad)                                 # (1, N_pad) f32
    b_eff = _pad_row(bias_mu.astype(jnp.float32)
                     + bias_sigma.astype(jnp.float32)
                     * eps_out.astype(jnp.float32), N_pad)                 # (1, N_pad) f32

    vmem_limit = 48 * 1024 * 1024   # safe on v7x (64 MiB), ample for these tiles

    if nk == 1:
        out = pl.pallas_call(
            _noisy_kernel_single,
            out_shape=jax.ShapeDtypeStruct((B_pad, N_pad), dtype),
            grid_spec=pltpu.PrefetchScalarGridSpec(
                num_scalar_prefetch=0,
                grid=(nn,),
                in_specs=[
                    pl.BlockSpec((B_pad, K_pad), lambda n: (0, 0)),   # x (resident)
                    pl.BlockSpec((1, K_pad), lambda n: (0, 0)),       # eps_in (resident)
                    pl.BlockSpec((tn, K_pad), lambda n: (n, 0)),      # W_mu
                    pl.BlockSpec((tn, K_pad), lambda n: (n, 0)),      # W_sigma
                    pl.BlockSpec((1, tn), lambda n: (0, n)),          # eps_out
                    pl.BlockSpec((1, tn), lambda n: (0, n)),          # b_eff
                ],
                out_specs=pl.BlockSpec((B_pad, tn), lambda n: (0, n)),
            ),
            compiler_params=pltpu.CompilerParams(
                dimension_semantics=("parallel",),
                vmem_limit_bytes=vmem_limit,
            ),
        )(xp, eps_in_row, wmu, wsig, eps_out_row, b_eff)
    else:
        out = pl.pallas_call(
            functools.partial(_noisy_kernel_multi, tk=tk),
            out_shape=jax.ShapeDtypeStruct((B_pad, N_pad), dtype),
            grid_spec=pltpu.PrefetchScalarGridSpec(
                num_scalar_prefetch=0,
                grid=(nn, nk),            # N parallel (leading), K reduction last
                in_specs=[
                    pl.BlockSpec((B_pad, K_pad), lambda n, k: (0, 0)),   # x (resident)
                    pl.BlockSpec((1, K_pad), lambda n, k: (0, 0)),       # eps_in (resident)
                    pl.BlockSpec((tn, tk), lambda n, k: (n, k)),         # W_mu
                    pl.BlockSpec((tn, tk), lambda n, k: (n, k)),         # W_sigma
                    pl.BlockSpec((1, tn), lambda n, k: (0, n)),          # eps_out
                    pl.BlockSpec((1, tn), lambda n, k: (0, n)),          # b_eff
                ],
                out_specs=pl.BlockSpec((B_pad, tn), lambda n, k: (0, n)),
                scratch_shapes=[pltpu.VMEM((B_pad, tn), jnp.float32)],
            ),
            compiler_params=pltpu.CompilerParams(
                dimension_semantics=("parallel", "arbitrary"),
                vmem_limit_bytes=vmem_limit,
            ),
        )(xp, eps_in_row, wmu, wsig, eps_out_row, b_eff)

    return out[:B, :N]


def scale_noise(key, size):
    """f(x) = sgn(x) * sqrt(|x|) with x ~ N(0, 1)."""
    x = jax.random.normal(key, (size,), dtype=jnp.float32)
    return jnp.sign(x) * jnp.sqrt(jnp.abs(x))


def init_noisy_linear(key, in_features, out_features, std_init=0.5):
    """Re-implementation of NoisyLinear.reset_parameters() / reset_noise().

    Returns the factored noise (eps_in, eps_out); the module's buffers are
    weight_epsilon = outer(eps_out, eps_in) and bias_epsilon = eps_out.
    """
    k_wmu, k_bmu, k_eps_in, k_eps_out = jax.random.split(key, 4)
    mu_range = 1.0 / math.sqrt(in_features)

    weight_mu = jax.random.uniform(k_wmu, (out_features, in_features),
                                   minval=-mu_range, maxval=mu_range,
                                   dtype=jnp.float32)
    weight_sigma = jnp.full((out_features, in_features),
                            std_init / math.sqrt(in_features), jnp.float32)
    bias_mu = jax.random.uniform(k_bmu, (out_features,),
                                 minval=-mu_range, maxval=mu_range,
                                 dtype=jnp.float32)
    bias_sigma = jnp.full((out_features,),
                          std_init / math.sqrt(out_features), jnp.float32)

    eps_in = scale_noise(k_eps_in, in_features)
    eps_out = scale_noise(k_eps_out, out_features)
    return weight_mu, weight_sigma, bias_mu, bias_sigma, eps_in, eps_out


if __name__ == "__main__":
    # ---- Small demo shape (single-K fast path) ----
    batch, in_features, out_features = 8, 32, 64
    root = jax.random.PRNGKey(0)
    k_params, k_x = jax.random.split(root)

    wmu, wsig, bmu, bsig, eps_in, eps_out = init_noisy_linear(
        k_params, in_features, out_features, std_init=0.5)
    x = jax.random.normal(k_x, (batch, in_features), dtype=jnp.float32)

    y = jax.block_until_ready(
        noisy_linear_forward(x, wmu, wsig, bmu, bsig, eps_in, eps_out))

    weight_eps = jnp.outer(eps_out, eps_in)          # module's weight_epsilon buffer
    y_ref = x @ (wmu + wsig * weight_eps).T + (bmu + bsig * eps_out)
    assert y.shape == (batch, out_features)
    assert jnp.allclose(y, y_ref, atol=2e-4, rtol=2e-4), \
        float(jnp.max(jnp.abs(y - y_ref)))

    # ---- Multi-K / multi-N path (exercises the f32 accumulator kernel) ----
    in2, out2 = 640, 256
    wmu2, wsig2, bmu2, bsig2, ei2, eo2 = init_noisy_linear(
        jax.random.PRNGKey(1), in2, out2, std_init=0.5)
    x2 = jax.random.normal(jax.random.PRNGKey(2), (4, in2), dtype=jnp.float32)
    y2 = jax.block_until_ready(
        noisy_linear_forward(x2, wmu2, wsig2, bmu2, bsig2, ei2, eo2,
                             tile_n=128, tile_k=256))
    y2_ref = x2 @ (wmu2 + wsig2 * jnp.outer(eo2, ei2)).T + (bmu2 + bsig2 * eo2)
    assert jnp.allclose(y2, y2_ref, atol=5e-4, rtol=5e-4), \
        float(jnp.max(jnp.abs(y2 - y2_ref)))

    # ---- bf16 weight-streaming path (halved HBM traffic, f32 accumulation) ----
    y_b = jax.block_until_ready(
        noisy_linear_forward(x.astype(jnp.bfloat16),
                             wmu.astype(jnp.bfloat16), wsig.astype(jnp.bfloat16),
                             bmu, bsig, eps_in, eps_out))
    assert jnp.allclose(y_b.astype(jnp.float32), y_ref, atol=5e-2, rtol=5e-2)

    print("KERNEL_OK")
</pallas_src>

<mosaic_0001>
module attributes {stable_mosaic.version = 11 : i64} {
  func.func @_noisy_kernel_single(%arg0: i32, %arg1: memref<8x128xf32, #tpu.memory_space<vmem>>, %arg2: memref<1x128xf32, #tpu.memory_space<vmem>>, %arg3: memref<128x128xf32, #tpu.memory_space<vmem>>, %arg4: memref<128x128xf32, #tpu.memory_space<vmem>>, %arg5: memref<1x128xf32, #tpu.memory_space<vmem>>, %arg6: memref<1x128xf32, #tpu.memory_space<vmem>>, %arg7: memref<8x128xf32, #tpu.memory_space<vmem>>) attributes {dimension_semantics = [#tpu.dimension_semantics<parallel>], iteration_bounds = array<i64: 1>, scalar_prefetch = 0 : i64, scratch_operands = 0 : i64, tpu.core_type = #tpu.core_type<tc>, window_params = [{pipeline_mode = #tpu.pipeline_mode<synchronous>, transform_indices = @transform_0, window_bounds = array<i64: 8, 128>}, {pipeline_mode = #tpu.pipeline_mode<synchronous>, transform_indices = @transform_1, window_bounds = array<i64: 1, 128>}, {transform_indices = @transform_2, window_bounds = array<i64: 128, 128>}, {transform_indices = @transform_3, window_bounds = array<i64: 128, 128>}, {transform_indices = @transform_4, window_bounds = array<i64: 1, 128>}, {transform_indices = @transform_5, window_bounds = array<i64: 1, 128>}, {transform_indices = @transform_6, window_bounds = array<i64: 8, 128>}]} {
    %c0 = arith.constant 0 : index
    %c0_0 = arith.constant 0 : index
    %0 = vector.load %arg1[%c0, %c0_0] : memref<8x128xf32, #tpu.memory_space<vmem>>, vector<8x128xf32>
    %c0_1 = arith.constant 0 : index
    %c0_2 = arith.constant 0 : index
    %1 = vector.load %arg2[%c0_1, %c0_2] : memref<1x128xf32, #tpu.memory_space<vmem>>, vector<1x128xf32>
    %c0_3 = arith.constant 0 : index
    %c0_4 = arith.constant 0 : index
    %2 = vector.load %arg3[%c0_3, %c0_4] : memref<128x128xf32, #tpu.memory_space<vmem>>, vector<128x128xf32>
    %c0_5 = arith.constant 0 : index
    %c0_6 = arith.constant 0 : index
    %3 = vector.load %arg4[%c0_5, %c0_6] : memref<128x128xf32, #tpu.memory_space<vmem>>, vector<128x128xf32>
    %c0_7 = arith.constant 0 : index
    %c0_8 = arith.constant 0 : index
    %4 = vector.load %arg5[%c0_7, %c0_8] : memref<1x128xf32, #tpu.memory_space<vmem>>, vector<1x128xf32>
    %5 = vector.broadcast %1 : vector<1x128xf32> to vector<8x128xf32>
    %6 = arith.mulf %0, %5 : vector<8x128xf32>
    %cst = arith.constant dense<0.000000e+00> : vector<8x128xf32>
    %7 = tpu.matmul %0, %2, %cst {dimension_numbers = #tpu.dot_dimension_numbers<[1], [1], [0], [0], [0, 0, 1, 0], [], []>} : vector<8x128xf32>, vector<128x128xf32>, vector<8x128xf32> -> vector<8x128xf32>
    %cst_9 = arith.constant dense<0.000000e+00> : vector<8x128xf32>
    %8 = tpu.matmul %6, %3, %cst_9 {dimension_numbers = #tpu.dot_dimension_numbers<[1], [1], [0], [0], [0, 0, 1, 0], [], []>} : vector<8x128xf32>, vector<128x128xf32>, vector<8x128xf32> -> vector<8x128xf32>
    %9 = vector.broadcast %4 : vector<1x128xf32> to vector<8x128xf32>
    %10 = arith.mulf %8, %9 : vector<8x128xf32>
    %11 = arith.addf %7, %10 : vector<8x128xf32>
    %c0_10 = arith.constant 0 : index
    %c0_11 = arith.constant 0 : index
    %12 = vector.load %arg6[%c0_10, %c0_11] : memref<1x128xf32, #tpu.memory_space<vmem>>, vector<1x128xf32>
    %13 = vector.broadcast %12 : vector<1x128xf32> to vector<8x128xf32>
    %14 = arith.addf %11, %13 : vector<8x128xf32>
    %c0_12 = arith.constant 0 : index
    %c0_13 = arith.constant 0 : index
    %15 = vector.load %arg7[%c0_12, %c0_13] : memref<8x128xf32, #tpu.memory_space<vmem>>, vector<8x128xf32>
    tpu.vector_store %arg7[%c0_12, %c0_13], %14 {strides = array<i32>} : memref<8x128xf32, #tpu.memory_space<vmem>>, vector<8x128xf32>,
    return
  }
  func.func @transform_0(%arg0: i32) -> (i32, i32) {
    %c0_i32 = arith.constant 0 : i32
    %c0_i32_0 = arith.constant 0 : i32
    %c0_i32_1 = arith.constant 0 : i32
    return %c0_i32, %c0_i32_0 : i32, i32
  }
  func.func @transform_1(%arg0: i32) -> (i32, i32) {
    %c0_i32 = arith.constant 0 : i32
    %c0_i32_0 = arith.constant 0 : i32
    %c0_i32_1 = arith.constant 0 : i32
    return %c0_i32, %c0_i32_0 : i32, i32
  }
  func.func @transform_2(%arg0: i32) -> (i32, i32) {
    %c0_i32 = arith.constant 0 : i32
    %c0_i32_0 = arith.constant 0 : i32
    return %arg0, %c0_i32 : i32, i32
  }
  func.func @transform_3(%arg0: i32) -> (i32, i32) {
    %c0_i32 = arith.constant 0 : i32
    %c0_i32_0 = arith.constant 0 : i32
    return %arg0, %c0_i32 : i32, i32
  }
  func.func @transform_4(%arg0: i32) -> (i32, i32) {
    %c0_i32 = arith.constant 0 : i32
    %c0_i32_0 = arith.constant 0 : i32
    return %c0_i32, %arg0 : i32, i32
  }
  func.func @transform_5(%arg0: i32) -> (i32, i32) {
    %c0_i32 = arith.constant 0 : i32
    %c0_i32_0 = arith.constant 0 : i32
    return %c0_i32, %arg0 : i32, i32
  }
  func.func @transform_6(%arg0: i32) -> (i32, i32) {
    %c0_i32 = arith.constant 0 : i32
    %c0_i32_0 = arith.constant 0 : i32
    return %c0_i32, %arg0 : i32, i32
  }
}

</mosaic_0001>

<llo_original>
// kernel: tpu_custom_call.1
$region0: #{tpu_custom_call.1}
  #allocation0 [shape = 'u32[]', space=smem, size = 0x4, offset = 0x4, fixed_abs, tag = 'smem constant byte address 0x4 - core index']
  #allocation1 [shape = 'u32[144,128]{1,0:T(1,128)}', space=vmem, size = 0x12000, scoped, tag = 'internal scratch']
  %s0 = inlined_call_operand.hbm [shape: f32[8,128], index: 0, kind: input, shape index: {}]
  %s1 = inlined_call_operand.vmem [shape: f32[1,128], index: 1, kind: input, shape index: {}]
  %s2 = inlined_call_operand.hbm [shape: f32[128,128], index: 2, kind: input, shape index: {}]
  %s3 = inlined_call_operand.hbm [shape: f32[128,128], index: 3, kind: input, shape index: {}]
  %s4 = inlined_call_operand.vmem [shape: f32[1,128], index: 4, kind: input, shape index: {}]
  %s5 = inlined_call_operand.vmem [shape: f32[1,128], index: 5, kind: input, shape index: {}]
  %s6 = inlined_call_operand.hbm [shape: f32[8,128], index: 6, kind: output, shape index: {}]
  %s7 = sld [smem:[#allocation0]]
  $region46: #{tpu_custom_call.1} parent=0
    _
  %s9 = ssub.s32 1, %s7
  %s10 = scalar_select 0, %s9, %s7
  $region1: #{tpu_custom_call.1} parent=0
    #allocation2 [shape = 'u8[4096]{0}', space=vmem, size = 0x1000, scoped, tag = 'input window, operand 0, single buffered']
    #allocation3 [shape = 's32[1]{0}', space=sflag, size = 0x4, scoped, tag = 'scoped memory for tpu_custom_call.1']
    #allocation4 [shape = 's32[1]{0}', space=sflag, size = 0x4, scoped, tag = 'scoped memory for tpu_custom_call.1']
    #allocation5 [shape = 'u8[65536]{0}', space=vmem, size = 0x10000, scoped, tag = 'input window, operand 2, single buffered']
    #allocation6 [shape = 's32[1]{0}', space=sflag, size = 0x4, scoped, tag = 'scoped memory for tpu_custom_call.1']
    #allocation7 [shape = 'u8[65536]{0}', space=vmem, size = 0x10000, scoped, tag = 'input window, operand 3, single buffered']
    #allocation8 [shape = 'u8[4096]{0}', space=vmem, size = 0x1000, scoped, tag = 'output window, operand 0, single buffered']
    %11 = vsyncpa [#allocation3], 0
    %12 = vsyncpa [#allocation6], 0
    %13 = vsyncpa [#allocation4], 0
    // Predicated region
    $region2: #{tpu_custom_call.1} parent=1 // pred_check
      _
    $region3: #{tpu_custom_call.1} parent=1 // pred_check_branch
      %15 = sbr.rel (0) target = $region5
    $region4: #{tpu_custom_call.1} parent=1 // pred_region
      %s17 = ssub.s32 128, 128
      %18 = vsyncadd [#allocation3], %s17
      %s20 = sshll.u32 [#allocation2], 4
      %s21 = int_to_ptr.vmem [resolvable:$true] %s20
      %23 = dma.hbm_to_vmem [thread:$0]  %s0, 128, %s21, [#allocation3]
    $region5: #{tpu_custom_call.1} parent=1 // pred_fallthru
      _
    // Predicated region
    $region6: #{tpu_custom_call.1} parent=1 // pred_check
      _
    $region7: #{tpu_custom_call.1} parent=1 // pred_check_branch
      %25 = sbr.rel (0) target = $region9
    $region8: #{tpu_custom_call.1} parent=1 // pred_region
      _
    $region9: #{tpu_custom_call.1} parent=1 // pred_fallthru
      _
    // Predicated region
    $region10: #{tpu_custom_call.1} parent=1 // pred_check
      _
    $region11: #{tpu_custom_call.1} parent=1 // pred_check_branch
      %27 = sbr.rel (0) target = $region13
    $region12: #{tpu_custom_call.1} parent=1 // pred_region
      %s29 = ssub.s32 2048, 2048
      %30 = vsyncadd [#allocation6], %s29
      %s31 = sshll.u32 [#allocation5], 4
      %s32 = int_to_ptr.vmem [resolvable:$true] %s31
      %37 = dma.hbm_to_vmem [thread:$0]  %s2, 2048, %s32, [#allocation6], 128, 128, 8
    $region13: #{tpu_custom_call.1} parent=1 // pred_fallthru
      _
    // Predicated region
    $region14: #{tpu_custom_call.1} parent=1 // pred_check
      _
    $region15: #{tpu_custom_call.1} parent=1 // pred_check_branch
      %39 = sbr.rel (0) target = $region17
    $region16: #{tpu_custom_call.1} parent=1 // pred_region
      %s41 = ssub.s32 2048, 2048
      %42 = vsyncadd [#allocation6], %s41
      %s43 = sshll.u32 [#allocation7], 4
      %s44 = int_to_ptr.vmem [resolvable:$true] %s43
      %49 = dma.hbm_to_vmem [thread:$0]  %s3, 2048, %s44, [#allocation6], 128, 128, 8
    $region17: #{tpu_custom_call.1} parent=1 // pred_fallthru
      _
    // Predicated region
    $region18: #{tpu_custom_call.1} parent=1 // pred_check
      _
    $region19: #{tpu_custom_call.1} parent=1 // pred_check_branch
      %51 = sbr.rel (0) target = $region21
    $region20: #{tpu_custom_call.1} parent=1 // pred_region
      _
    $region21: #{tpu_custom_call.1} parent=1 // pred_fallthru
      _
    // Predicated region
    $region22: #{tpu_custom_call.1} parent=1 // pred_check
      _
    $region23: #{tpu_custom_call.1} parent=1 // pred_check_branch
      %53 = sbr.rel (0) target = $region25
    $region24: #{tpu_custom_call.1} parent=1 // pred_region
      _
    $region25: #{tpu_custom_call.1} parent=1 // pred_fallthru
      _
    // Predicated region
    $region26: #{tpu_custom_call.1} parent=1 // pred_check
      _
    $region27: #{tpu_custom_call.1} parent=1 // pred_check_branch
      %55 = sbr.rel (0) target = $region29
    $region28: #{tpu_custom_call.1} parent=1 // pred_region
      %56 = dma.done [#allocation3], 128
    $region29: #{tpu_custom_call.1} parent=1 // pred_fallthru
      _
    // Predicated region
    $region30: #{tpu_custom_call.1} parent=1 // pred_check
      _
    $region31: #{tpu_custom_call.1} parent=1 // pred_check_branch
      %58 = sbr.rel (0) target = $region33
    $region32: #{tpu_custom_call.1} parent=1 // pred_region
      %59 = dma.done [#allocation6], 2048
    $region33: #{tpu_custom_call.1} parent=1 // pred_fallthru
      _
    // Predicated region
    $region34: #{tpu_custom_call.1} parent=1 // pred_check
      _
    $region35: #{tpu_custom_call.1} parent=1 // pred_check_branch
      %61 = sbr.rel (0) target = $region37
    $region36: #{tpu_custom_call.1} parent=1 // pred_region
      %62 = dma.done [#allocation6], 2048
    $region37: #{tpu_custom_call.1} parent=1 // pred_fallthru
      _
    %v63 = vld [vmem:[#allocation2] sm:$0xff]
    %v64 = vld [vmem:[%s1] sm:$0x1]
    %v65 = vld [vmem:[#allocation5] sm:$0xff]
    %v66 = vld [vmem:[#allocation5 + $0x8] sm:$0xff]
    %v67 = vld [vmem:[#allocation5 + $0x10] sm:$0xff]
    %v68 = vld [vmem:[#allocation5 + $0x18] sm:$0xff]
    %v69 = vld [vmem:[#allocation5 + $0x20] sm:$0xff]
    %v70 = vld [vmem:[#allocation5 + $0x28] sm:$0xff]
    %v71 = vld [vmem:[#allocation5 + $0x30] sm:$0xff]
    %v72 = vld [vmem:[#allocation5 + $0x38] sm:$0xff]
    %v73 = vld [vmem:[#allocation5 + $0x40] sm:$0xff]
    %v74 = vld [vmem:[#allocation5 + $0x48] sm:$0xff]
    %v75 = vld [vmem:[#allocation5 + $0x50] sm:$0xff]
    %v76 = vld [vmem:[#allocation5 + $0x58] sm:$0xff]
    %v77 = vld [vmem:[#allocation5 + $0x60] sm:$0xff]
    %v78 = vld [vmem:[#allocation5 + $0x68] sm:$0xff]
    %v79 = vld [vmem:[#allocation5 + $0x70] sm:$0xff]
    %v80 = vld [vmem:[#allocation5 + $0x78] sm:$0xff]
    %v81 = vld [vmem:[#allocation7] sm:$0xff]
    %v82 = vld [vmem:[#allocation7 + $0x8] sm:$0xff]
    %v83 = vld [vmem:[#allocation7 + $0x10] sm:$0xff]
    %v84 = vld [vmem:[#allocation7 + $0x18] sm:$0xff]
    %v85 = vld [vmem:[#allocation7 + $0x20] sm:$0xff]
    %v86 = vld [vmem:[#allocation7 + $0x28] sm:$0xff]
    %v87 = vld [vmem:[#allocation7 + $0x30] sm:$0xff]
    %v88 = vld [vmem:[#allocation7 + $0x38] sm:$0xff]
    %v89 = vld [vmem:[#allocation7 + $0x40] sm:$0xff]
    %v90 = vld [vmem:[#allocation7 + $0x48] sm:$0xff]
    %v91 = vld [vmem:[#allocation7 + $0x50] sm:$0xff]
    %v92 = vld [vmem:[#allocation7 + $0x58] sm:$0xff]
    %v93 = vld [vmem:[#allocation7 + $0x60] sm:$0xff]
    %v94 = vld [vmem:[#allocation7 + $0x68] sm:$0xff]
    %v95 = vld [vmem:[#allocation7 + $0x70] sm:$0xff]
    %v96 = vld [vmem:[#allocation7 + $0x78] sm:$0xff]
    %v97 = vld [vmem:[%s4] sm:$0x1]
    %v99 = vlaneseq
    %v100 = vshrl.u32 %v99, 7
    %v101 = vsub.s32 0, %v100
    %v102 = vrot.slane %v64, %v101
    %v104 = vmul.f32 %v63, %v102
    %105 = vmatprep.subr.mxu0 0.0
    %106 = vmatpush1.xpose.msra.mxu0 %v81
    %107 = vmatprep.subr.mxu0 0.0
    %108 = vmatpush1.xpose.msra.mxu0 %v82
    %109 = vmatprep.subr.mxu0 0.0
    %110 = vmatpush1.xpose.msra.mxu0 %v83
    %111 = vmatprep.subr.mxu0 0.0
    %112 = vmatpush1.xpose.msra.mxu0 %v84
    %113 = vmatprep.subr.mxu0 0.0
    %114 = vmatpush1.xpose.msra.mxu0 %v85
    %115 = vmatprep.subr.mxu0 0.0
    %116 = vmatpush1.xpose.msra.mxu0 %v86
    %117 = vmatprep.subr.mxu0 0.0
    %118 = vmatpush1.xpose.msra.mxu0 %v87
    %119 = vmatprep.subr.mxu0 0.0
    %120 = vmatpush1.xpose.msra.mxu0 %v88
    %121 = vmatprep.subr.mxu0 0.0
    %122 = vmatpush1.xpose.msra.mxu0 %v89
    %123 = vmatprep.subr.mxu0 0.0
    %124 = vmatpush1.xpose.msra.mxu0 %v90
    %125 = vmatprep.subr.mxu0 0.0
    %126 = vmatpush1.xpose.msra.mxu0 %v91
    %127 = vmatprep.subr.mxu0 0.0
    %128 = vmatpush1.xpose.msra.mxu0 %v92
    %129 = vmatprep.subr.mxu0 0.0
    %130 = vmatpush1.xpose.msra.mxu0 %v93
    %131 = vmatprep.subr.mxu0 0.0
    %132 = vmatpush1.xpose.msra.mxu0 %v94
    %133 = vmatprep.subr.mxu0 0.0
    %134 = vmatpush1.xpose.msra.mxu0 %v95
    %135 = vmatprep.subr.mxu0 0.0
    %136 = vmatpush1.xpose.msra.mxu0 %v96
    %137 = vmatprep.subr.mxu0 0.0
    %138 = vmatpush1.xpose.msra.mxu0 0.0
    %139 = vmatprep.subr.mxu0 0.0
    %140 = vmatpush1.xpose.msra.mxu0 0.0
    %141 = vmatprep.subr.mxu0 0.0
    %142 = vmatpush1.xpose.msra.mxu0 0.0
    %143 = vmatprep.subr.mxu0 0.0
    %144 = vmatpush1.xpose.msra.mxu0 0.0
    %145 = vmatprep.subr.mxu0 0.0
    %146 = vmatpush1.xpose.msra.mxu0 0.0
    %147 = vmatprep.subr.mxu0 0.0
    %148 = vmatpush1.xpose.msra.mxu0 0.0
    %149 = vmatprep.subr.mxu0 0.0
    %150 = vmatpush1.xpose.msra.mxu0 0.0
    %151 = vmatprep.subr.mxu0 0.0
    %152 = vmatpush1.xpose.msra.mxu0 0.0
    %153 = vmatprep.subr.mxu0 0.0
    %154 = vmatpush1.xpose.msra.mxu0 0.0
    %155 = vmatprep.subr.mxu0 0.0
    %156 = vmatpush1.xpose.msra.mxu0 0.0
    %157 = vmatprep.subr.mxu0 0.0
    %158 = vmatpush1.xpose.msra.mxu0 0.0
    %159 = vmatprep.subr.mxu0 0.0
    %160 = vmatpush1.xpose.msra.mxu0 0.0
    %161 = vmatprep.subr.mxu0 0.0
    %162 = vmatpush1.xpose.msra.mxu0 0.0
    %163 = vmatprep.subr.mxu0 0.0
    %164 = vmatpush1.xpose.msra.mxu0 0.0
    %165 = vmatprep.subr.mxu0 0.0
    %166 = vmatpush1.xpose.msra.mxu0 0.0
    %167 = vmatprep.subr.mxu0 0.0
    %168 = vmatpush1.xpose.msra.mxu0 0.0
    %169 = vmatprep.mubr.f32.mxu0 0.0
    %170 = vmatmul.mubr.f32.gmra.mrb[0].mxu0 %v104
    %v171 = vpop.f32.mrb[0].mxu0
    %v172 = vadd.f32 0.0, %v171
    %v173 = vpop.f32.mrb[0].mxu0
    %174 = vdwg.mxu0
    %v176 = vlaneseq
    %v177 = vshrl.u32 %v176, 7
    %v178 = vsub.s32 0, %v177
    %v179 = vrot.slane %v97, %v178
    %v181 = vmul.f32 %v172, %v179
    %182 = vmatprep.subr.mxu0 0.0
    %183 = vmatpush1.xpose.msra.mxu0 %v65
    %184 = vmatprep.subr.mxu0 0.0
    %185 = vmatpush1.xpose.msra.mxu0 %v66
    %186 = vmatprep.subr.mxu0 0.0
    %187 = vmatpush1.xpose.msra.mxu0 %v67
    %188 = vmatprep.subr.mxu0 0.0
    %189 = vmatpush1.xpose.msra.mxu0 %v68
    %190 = vmatprep.subr.mxu0 0.0
    %191 = vmatpush1.xpose.msra.mxu0 %v69
    %192 = vmatprep.subr.mxu0 0.0
    %193 = vmatpush1.xpose.msra.mxu0 %v70
    %194 = vmatprep.subr.mxu0 0.0
    %195 = vmatpush1.xpose.msra.mxu0 %v71
    %196 = vmatprep.subr.mxu0 0.0
    %197 = vmatpush1.xpose.msra.mxu0 %v72
    %198 = vmatprep.subr.mxu0 0.0
    %199 = vmatpush1.xpose.msra.mxu0 %v73
    %200 = vmatprep.subr.mxu0 0.0
    %201 = vmatpush1.xpose.msra.mxu0 %v74
    %202 = vmatprep.subr.mxu0 0.0
    %203 = vmatpush1.xpose.msra.mxu0 %v75
    %204 = vmatprep.subr.mxu0 0.0
    %205 = vmatpush1.xpose.msra.mxu0 %v76
    %206 = vmatprep.subr.mxu0 0.0
    %207 = vmatpush1.xpose.msra.mxu0 %v77
    %208 = vmatprep.subr.mxu0 0.0
    %209 = vmatpush1.xpose.msra.mxu0 %v78
    %210 = vmatprep.subr.mxu0 0.0
    %211 = vmatpush1.xpose.msra.mxu0 %v79
    %212 = vmatprep.subr.mxu0 0.0
    %213 = vmatpush1.xpose.msra.mxu0 %v80
    %214 = vmatprep.subr.mxu0 0.0
    %215 = vmatpush1.xpose.msra.mxu0 0.0
    %216 = vmatprep.subr.mxu0 0.0
    %217 = vmatpush1.xpose.msra.mxu0 0.0
    %218 = vmatprep.subr.mxu0 0.0
    %219 = vmatpush1.xpose.msra.mxu0 0.0
    %220 = vmatprep.subr.mxu0 0.0
    %221 = vmatpush1.xpose.msra.mxu0 0.0
    %222 = vmatprep.subr.mxu0 0.0
    %223 = vmatpush1.xpose.msra.mxu0 0.0
    %224 = vmatprep.subr.mxu0 0.0
    %225 = vmatpush1.xpose.msra.mxu0 0.0
    %226 = vmatprep.subr.mxu0 0.0
    %227 = vmatpush1.xpose.msra.mxu0 0.0
    %228 = vmatprep.subr.mxu0 0.0
    %229 = vmatpush1.xpose.msra.mxu0 0.0
    %230 = vmatprep.subr.mxu0 0.0
    %231 = vmatpush1.xpose.msra.mxu0 0.0
    %232 = vmatprep.subr.mxu0 0.0
    %233 = vmatpush1.xpose.msra.mxu0 0.0
    %234 = vmatprep.subr.mxu0 0.0
    %235 = vmatpush1.xpose.msra.mxu0 0.0
    %236 = vmatprep.subr.mxu0 0.0
    %237 = vmatpush1.xpose.msra.mxu0 0.0
    %238 = vmatprep.subr.mxu0 0.0
    %239 = vmatpush1.xpose.msra.mxu0 0.0
    %240 = vmatprep.subr.mxu0 0.0
    %241 = vmatpush1.xpose.msra.mxu0 0.0
    %242 = vmatprep.subr.mxu0 0.0
    %243 = vmatpush1.xpose.msra.mxu0 0.0
    %244 = vmatprep.subr.mxu0 0.0
    %245 = vmatpush1.xpose.msra.mxu0 0.0
    %246 = vmatprep.mubr.f32.mxu0 0.0
    %247 = vmatmul.mubr.f32.gmra.mrb[0].mxu0 %v63
    %v248 = vpop.f32.mrb[0].mxu0
    %v249 = vadd.f32 %v181, %v248
    %v250 = vpop.f32.mrb[0].mxu0
    %251 = vdwg.mxu0
    %v252 = vld [vmem:[%s5] sm:$0x1]
    %v254 = vlaneseq
    %v255 = vshrl.u32 %v254, 7
    %v256 = vsub.s32 0, %v255
    %v257 = vrot.slane %v252, %v256
    %v259 = vadd.f32 %v249, %v257
    %260 = vst [vmem:[#allocation8] sm:$0xff] %v259
    // Predicated region
    $region38: #{tpu_custom_call.1} parent=1 // pred_check
      _
    $region39: #{tpu_custom_call.1} parent=1 // pred_check_branch
      %262 = sbr.rel (0) target = $region41
    $region40: #{tpu_custom_call.1} parent=1 // pred_region
      %s264 = ssub.s32 128, 128
      %265 = vsyncadd [#allocation4], %s264
      %s267 = sshll.u32 [#allocation8], 4
      %s268 = int_to_ptr.vmem [resolvable:$true] %s267
      %270 = dma.vmem_to_hbm [thread:$0]  %s268, 128, %s6, [#allocation4]
    $region41: #{tpu_custom_call.1} parent=1 // pred_fallthru
      _
    // Predicated region
    $region42: #{tpu_custom_call.1} parent=1 // pred_check
      _
    $region43: #{tpu_custom_call.1} parent=1 // pred_check_branch
      %272 = sbr.rel (0) target = $region45
    $region44: #{tpu_custom_call.1} parent=1 // pred_region
      %273 = dma.done [#allocation4], 128
    $region45: #{tpu_custom_call.1} parent=1 // pred_fallthru
      _
    %274 = vsyncpa [#allocation3], 1
    %275 = vsyncpa [#allocation6], 1
    %276 = vsyncpa [#allocation4], 1

</llo_original>
